<compile_context>
chip_gen: v6e
topology: v6e:2x2x1
jax: 0.10.0
libtpu: 0.0.40
codegen_flags: <defaults>
</compile_context>

<pallas_src>
import functools

import jax
import jax.numpy as jnp
from jax.experimental import pallas as pl
from jax.experimental.pallas import tpu as pltpu


_LANE = 128
_FUSED_MAX_ROWS = 512   # single-tile fused path up to this many padded rows
_TB_BIG = 512           # batch tile for the multi-tile ("parallel" grid) path
_NEG = -1e30


def _round_up(x, m):
    return (x + m - 1) // m * m


# ---------------------------------------------------------------------------
# Shared in-kernel math
# ---------------------------------------------------------------------------
def _fused_mlp(x_f32, w1, b1, w2, b2, w3, b3):
    """bf16 MXU matmuls with f32 accumulation; element-wise math stays f32."""
    x = x_f32.astype(jnp.bfloat16)
    h1 = jnp.tanh(jnp.dot(x, w1, preferred_element_type=jnp.float32) + b1)
    h2 = jnp.tanh(jnp.dot(h1.astype(jnp.bfloat16), w2,
                          preferred_element_type=jnp.float32) + b2)
    return jnp.dot(h2.astype(jnp.bfloat16), w3,
                   preferred_element_type=jnp.float32) + b3


def _head_math(feat, act_f, gumbel, lse_row, action_size):
    """Gumbel-max sample, log-prob gathers, lane-dense packing.

    feat    : [rows, OP] f32   lanes [0, A) = logits, lane A = value
    act_f   : [rows, 1]  f32   float(action)
    gumbel  : [rows, OP] f32   i.i.d. Gumbel(0, 1) noise
    lse_row : [1, OP]    f32   dim-0 (batch) log-sum-exp of the logits
    returns : [rows, OP] f32   lane 0 = float(pi), 1 = logp, 2 = logp_pi,
                               3 = value, rest 0
    """
    rows, lanes = feat.shape
    lane = jax.lax.broadcasted_iota(jnp.int32, (rows, lanes), 1)

    # Non-sampling outputs first (short live ranges for the Gumbel block).
    value = feat[:, action_size:action_size + 1]          # static lane slice
    logp_all = feat - lse_row                             # dim-0 log_softmax
    act_i = act_f.astype(jnp.int32)
    logp = jnp.sum(jnp.where(lane == act_i, logp_all, 0.0),
                   axis=1, keepdims=True)

    # Categorical(logits).sample() via Gumbel-max over the action lanes
    # (mask folded straight into scores; no separate `logits` temporary).
    scores = jnp.where(lane < action_size, feat + gumbel, _NEG)
    smax = jnp.max(scores, axis=1, keepdims=True)
    pick = jnp.where(scores >= smax, lane, jnp.int32(lanes))
    pi = jnp.min(pick, axis=1, keepdims=True)              # lowest-index tie-break
    logp_pi = jnp.sum(jnp.where(lane == pi, logp_all, 0.0),
                      axis=1, keepdims=True)

    return jnp.where(
        lane == 0, pi.astype(jnp.float32),
        jnp.where(lane == 1, logp,
                  jnp.where(lane == 2, logp_pi,
                            jnp.where(lane == 3, value, 0.0))))


# ---------------------------------------------------------------------------
# Kernels
# ---------------------------------------------------------------------------
def _fused_ac_kernel(obs_ref, w1_ref, b1_ref, w2_ref, b2_ref, w3_ref, b3_ref,
                     gumbel_ref, out_ref, *, action_size, act_lane, batch):
    """Single-tile fused forward: MLP + dim-0 LSE + sampling head."""
    x = obs_ref[...]                                       # [B_pad, OBS_PAD] f32
    act_f = x[:, act_lane:act_lane + 1]                    # float(action) lane
    feat = _fused_mlp(x, w1_ref[...], b1_ref[...], w2_ref[...], b2_ref[...],
                      w3_ref[...], b3_ref[...])            # [B_pad, OP] f32

    # log_softmax over dim 0 (the BATCH axis, as in the torch source),
    # restricted to the real rows (padded rows must not contribute).
    row = jax.lax.broadcasted_iota(jnp.int32, feat.shape, 0)
    valid = row < batch
    m0 = jnp.max(jnp.where(valid, feat, _NEG), axis=0, keepdims=True)
    s0 = jnp.sum(jnp.where(valid, jnp.exp(feat - m0), 0.0),
                 axis=0, keepdims=True)
    lse0 = m0 + jnp.log(s0)

    out_ref[...] = _head_math(feat, act_f, gumbel_ref[...], lse0, action_size)


def _mlp_kernel(obs_ref, w1_ref, b1_ref, w2_ref, b2_ref, w3_ref, b3_ref,
                feat_ref, *, action_size, act_lane):
    """Tiled fused policy+value MLP -> feature slab [TB, OP]."""
    x = obs_ref[...]
    act_f = x[:, act_lane:act_lane + 1]
    feat = _fused_mlp(x, w1_ref[...], b1_ref[...], w2_ref[...], b2_ref[...],
                      w3_ref[...], b3_ref[...])
    lane = jax.lax.broadcasted_iota(jnp.int32, feat.shape, 1)
    # Stash float(action) in spare lane A+1 so the head kernel stays lane-dense.
    feat_ref[...] = jnp.where(lane == action_size + 1, act_f, feat)


def _head_kernel(feat_ref, lse_ref, gumbel_ref, out_ref, *, action_size):
    """Tiled sampling / log-prob head over the feature slab."""
    feat = feat_ref[...]
    act_f = feat[:, action_size + 1:action_size + 2]
    out_ref[...] = _head_math(feat, act_f, gumbel_ref[...], lse_ref[...],
                              action_size)


# ---------------------------------------------------------------------------
# Parameters
# ---------------------------------------------------------------------------
def init_params(key, obs_size, action_size, hidden_sizes=(64, 64)):
    """Deterministic synthetic parameters for both MLPs ([in, out] weights)."""
    def linear(key, fan_in, fan_out):
        kw, kb = jax.random.split(key)
        w = jax.random.normal(kw, (fan_in, fan_out), jnp.float32) * 0.1
        b = jax.random.normal(kb, (1, fan_out), jnp.float32) * 0.1
        return w, b

    keys = jax.random.split(key, 6)
    h1, h2 = hidden_sizes
    w1, b1 = linear(keys[0], obs_size, h1)
    w2, b2 = linear(keys[1], h1, h2)
    w3, b3 = linear(keys[2], h2, action_size)
    vw1, vb1 = linear(keys[3], obs_size, h1)
    vw2, vb2 = linear(keys[4], h1, h2)
    vw3, vb3 = linear(keys[5], h2, 1)
    return dict(w1=w1, b1=b1, w2=w2, b2=b2, w3=w3, b3=b3,
                vw1=vw1, vb1=vb1, vw2=vw2, vb2=vb2, vw3=vw3, vb3=vb3)


def pack_params(params):
    """Fuse policy+value MLPs into 128-lane weights (bf16 MXU operands).

    Runs ONCE at init, outside the jitted per-call path.
      layer1: [OBS_PAD, HP1] columns = W1 || VW1 (rows zero-padded to 128)
      layer2: [HP1, HP2]     block-diagonal(W2, VW2)
      layer3: [HP2, OP]      cols [0, A) -> policy logits, col A -> value
    """
    w1, b1, w2, b2, w3, b3 = (params[k] for k in ("w1", "b1", "w2", "b2", "w3", "b3"))
    vw1, vb1, vw2, vb2, vw3, vb3 = (
        params[k] for k in ("vw1", "vb1", "vw2", "vb2", "vw3", "vb3"))
    obs_size = w1.shape[0]
    h1p, h1v = w1.shape[1], vw1.shape[1]
    h2p, h2v = w2.shape[1], vw2.shape[1]
    a = w3.shape[1]
    obs_pad = _round_up(obs_size + 1, _LANE)   # +1 spare lane carries float(action)
    hp1 = _round_up(h1p + h1v, _LANE)
    hp2 = _round_up(h2p + h2v, _LANE)
    op = _round_up(a + 2, _LANE)               # lane a = value, lane a+1 = action stash

    w1f = jnp.zeros((obs_pad, hp1), jnp.float32)
    w1f = w1f.at[:obs_size, :h1p].set(w1).at[:obs_size, h1p:h1p + h1v].set(vw1)
    b1f = jnp.zeros((1, hp1), jnp.float32)
    b1f = b1f.at[:, :h1p].set(b1).at[:, h1p:h1p + h1v].set(vb1)

    w2f = jnp.zeros((hp1, hp2), jnp.float32)
    w2f = w2f.at[:h1p, :h2p].set(w2).at[h1p:h1p + h1v, h2p:h2p + h2v].set(vw2)
    b2f = jnp.zeros((1, hp2), jnp.float32)
    b2f = b2f.at[:, :h2p].set(b2).at[:, h2p:h2p + h2v].set(vb2)

    w3f = jnp.zeros((hp2, op), jnp.float32)
    w3f = w3f.at[:h2p, :a].set(w3).at[h2p:h2p + h2v, a:a + 1].set(vw3)
    b3f = jnp.zeros((1, op), jnp.float32)
    b3f = b3f.at[:, :a].set(b3).at[:, a:a + 1].set(vb3)

    packed = dict(w1=w1f.astype(jnp.bfloat16), b1=b1f,
                  w2=w2f.astype(jnp.bfloat16), b2=b2f,
                  w3=w3f.astype(jnp.bfloat16), b3=b3f)
    meta = dict(obs_size=obs_size, action_size=a,
                obs_pad=obs_pad, hp1=hp1, hp2=hp2, op=op)
    return packed, meta


# ---------------------------------------------------------------------------
# Wrapper
# ---------------------------------------------------------------------------
def make_mlp_actor_critic(packed, meta):
    """Build the jitted forward.  Packed bf16 weights are closed over, so the
    packing/cast graph never re-runs in the PPO inner loop."""
    w1f, b1f, w2f, b2f, w3f, b3f = (packed[k] for k in ("w1", "b1", "w2", "b2", "w3", "b3"))
    obs_size = meta["obs_size"]
    A = meta["action_size"]
    OBS_PAD, HP1, HP2, OP = meta["obs_pad"], meta["hp1"], meta["hp2"], meta["op"]

    # Resident weights: constant index_map -> block (0, 0).
    weight_specs = [
        pl.BlockSpec((OBS_PAD, HP1), lambda i: (0, 0)),
        pl.BlockSpec((1, HP1), lambda i: (0, 0)),
        pl.BlockSpec((HP1, HP2), lambda i: (0, 0)),
        pl.BlockSpec((1, HP2), lambda i: (0, 0)),
        pl.BlockSpec((HP2, OP), lambda i: (0, 0)),
        pl.BlockSpec((1, OP), lambda i: (0, 0)),
    ]
    flops_per_row = 2 * (OBS_PAD * HP1 + HP1 * HP2 + HP2 * OP)
    weight_bytes = 2 * (OBS_PAD * HP1 + HP1 * HP2 + HP2 * OP) + 4 * (HP1 + HP2 + OP)

    @jax.jit
    def forward(obs, action, key):
        """Returns (pi, logp, logp_pi, value) matching the torch forward."""
        B = obs.shape[0]
        fused = _round_up(B, 16) <= _FUSED_MAX_ROWS
        TB = _round_up(B, 16) if fused else _TB_BIG
        B_pad = _round_up(B, TB)
        NB = B_pad // TB

        # obs padded to 128 lanes (lane-dense loads, full (16,128) bf16 tiles);
        # float(action) rides in spare lane `obs_size` (W1 row there is zero).
        obs_pack = jnp.zeros((B_pad, OBS_PAD), jnp.float32)
        obs_pack = obs_pack.at[:B, :obs_size].set(obs.astype(jnp.float32))
        obs_pack = obs_pack.at[:B, obs_size].set(action.astype(jnp.float32))

        gumbel = jax.random.gumbel(key, (B_pad, OP), jnp.float32)

        if fused:
            # Single-tile fully fused forward: one pallas_call, no HBM
            # round trip of the feature slab, in-kernel dim-0 LSE.
            packed_out = pl.pallas_call(
                functools.partial(_fused_ac_kernel, action_size=A,
                                  act_lane=obs_size, batch=B),
                out_shape=jax.ShapeDtypeStruct((B_pad, OP), jnp.float32),
                grid_spec=pltpu.PrefetchScalarGridSpec(
                    num_scalar_prefetch=0,
                    grid=(1,),
                    in_specs=[pl.BlockSpec((B_pad, OBS_PAD), lambda i: (0, 0))]
                    + weight_specs
                    + [pl.BlockSpec((B_pad, OP), lambda i: (0, 0))],
                    out_specs=pl.BlockSpec((B_pad, OP), lambda i: (0, 0)),
                ),
                compiler_params=pltpu.CompilerParams(
                    dimension_semantics=("arbitrary",)),
                cost_estimate=pl.CostEstimate(
                    flops=B_pad * flops_per_row + 40 * B_pad * OP,
                    transcendentals=B_pad * (HP1 + HP2 + OP),
                    bytes_accessed=4 * B_pad * (OBS_PAD + 2 * OP) + weight_bytes),
            )(obs_pack, w1f, b1f, w2f, b2f, w3f, b3f, gumbel)
        else:
            # Large batch: batch-parallel tiles (NB >= 2 -> megacore on v7x).
            feat = pl.pallas_call(
                functools.partial(_mlp_kernel, action_size=A, act_lane=obs_size),
                out_shape=jax.ShapeDtypeStruct((B_pad, OP), jnp.float32),
                grid_spec=pltpu.PrefetchScalarGridSpec(
                    num_scalar_prefetch=0,
                    grid=(NB,),
                    in_specs=[pl.BlockSpec((TB, OBS_PAD), lambda i: (i, 0))]
                    + weight_specs,
                    out_specs=pl.BlockSpec((TB, OP), lambda i: (i, 0)),
                ),
                compiler_params=pltpu.CompilerParams(
                    dimension_semantics=("parallel",)),
                cost_estimate=pl.CostEstimate(
                    flops=B_pad * flops_per_row,
                    transcendentals=B_pad * (HP1 + HP2),
                    bytes_accessed=4 * B_pad * (OBS_PAD + OP) + NB * weight_bytes),
            )(obs_pack, w1f, b1f, w2f, b2f, w3f, b3f)

            # dim-0 log-sum-exp must see the whole batch -> tiny XLA reduction
            # between the two batch-parallel calls (real rows / real lanes).
            # TODO(synk): emit per-tile max/sum-exp partials from the MLP kernel
            # to avoid re-reading the feat slab for very large batches.
            logits = feat[:B, :A]
            m0 = jnp.max(logits, axis=0, keepdims=True)
            lse0 = m0 + jnp.log(jnp.sum(jnp.exp(logits - m0), axis=0,
                                        keepdims=True))
            lse_row = jnp.zeros((1, OP), jnp.float32).at[:, :A].set(lse0)

            packed_out = pl.pallas_call(
                functools.partial(_head_kernel, action_size=A),
                out_shape=jax.ShapeDtypeStruct((B_pad, OP), jnp.float32),
                grid_spec=pltpu.PrefetchScalarGridSpec(
                    num_scalar_prefetch=0,
                    grid=(NB,),
                    in_specs=[
                        pl.BlockSpec((TB, OP), lambda i: (i, 0)),
                        pl.BlockSpec((1, OP), lambda i: (0, 0)),
                        pl.BlockSpec((TB, OP), lambda i: (i, 0)),
                    ],
                    out_specs=pl.BlockSpec((TB, OP), lambda i: (i, 0)),
                ),
                compiler_params=pltpu.CompilerParams(
                    dimension_semantics=("parallel",)),
                cost_estimate=pl.CostEstimate(
                    flops=40 * B_pad * OP,
                    transcendentals=B_pad * OP,
                    bytes_accessed=12 * B_pad * OP + 4 * OP),
            )(feat, lse_row, gumbel)

        pi = packed_out[:B, 0].astype(jnp.int32)   # exact: action_size << 2^24
        logp = packed_out[:B, 1:2]
        logp_pi = packed_out[:B, 2:3]
        value = packed_out[:B, 3:4]
        return pi, logp, logp_pi, value

    return forward


# ---------------------------------------------------------------------------
# Pure-JAX reference (loose numeric sanity check of the f32 path)
# ---------------------------------------------------------------------------
def reference_forward(obs, action, params):
    def mlp(x, w1, b1, w2, b2, w3, b3):
        h = jnp.tanh(x @ w1 + b1)
        h = jnp.tanh(h @ w2 + b2)
        return h @ w3 + b3

    logits = mlp(obs, params["w1"], params["b1"], params["w2"], params["b2"],
                 params["w3"], params["b3"])
    value = mlp(obs, params["vw1"], params["vb1"], params["vw2"], params["vb2"],
                params["vw3"], params["vb3"])
    logp_all = jax.nn.log_softmax(logits, axis=0)   # dim 0, as in the source
    logp = jnp.take_along_axis(logp_all, action.reshape(-1, 1), axis=1)
    return logp_all, logp, value


if __name__ == "__main__":
    OBS, ACT = 16, 6
    key = jax.random.PRNGKey(0)
    (k_params, k_obs1, k_act1, k_n1,
     k_obs2, k_act2, k_n2) = jax.random.split(key, 7)

    params = init_params(k_params, OBS, ACT, hidden_sizes=(64, 64))
    packed, meta = pack_params(params)               # once, at init
    actor_critic = make_mlp_actor_critic(packed, meta)

    def run_check(B, k_obs, k_act, k_noise, atol=0.15):
        obs = jax.random.normal(k_obs, (B, OBS), jnp.float32)
        action = jax.random.randint(k_act, (B,), 0, ACT, jnp.int32)
        pi, logp, logp_pi, value = actor_critic(obs, action, k_noise)
        jax.block_until_ready((pi, logp, logp_pi, value))

        assert pi.shape == (B,) and pi.dtype == jnp.int32
        assert logp.shape == (B, 1) and logp_pi.shape == (B, 1)
        assert value.shape == (B, 1)
        assert bool(jnp.all((pi >= 0) & (pi < ACT)))

        logp_all_ref, logp_ref, value_ref = reference_forward(obs, action, params)
        logp_pi_ref = jnp.take_along_axis(logp_all_ref, pi.reshape(-1, 1), axis=1)
        assert bool(jnp.all(jnp.abs(logp - logp_ref) < atol)), "logp mismatch"
        assert bool(jnp.all(jnp.abs(logp_pi - logp_pi_ref) < atol)), "logp_pi mismatch"
        assert bool(jnp.all(jnp.abs(value - value_ref) < atol)), "value mismatch"

    run_check(8, k_obs1, k_act1, k_n1)     # single fused-kernel path (B_pad = 16)
    run_check(600, k_obs2, k_act2, k_n2)   # tiled two-kernel path (TB = 512, NB = 2)

    print("KERNEL_OK")
</pallas_src>

<mosaic_0001>
module attributes {stable_mosaic.version = 11 : i64} {
  func.func @_fused_ac_kernel(%arg0: i32, %arg1: memref<16x128xf32, #tpu.memory_space<vmem>>, %arg2: memref<128x128xbf16, #tpu.memory_space<vmem>>, %arg3: memref<1x128xf32, #tpu.memory_space<vmem>>, %arg4: memref<128x128xbf16, #tpu.memory_space<vmem>>, %arg5: memref<1x128xf32, #tpu.memory_space<vmem>>, %arg6: memref<128x128xbf16, #tpu.memory_space<vmem>>, %arg7: memref<1x128xf32, #tpu.memory_space<vmem>>, %arg8: memref<16x128xf32, #tpu.memory_space<vmem>>, %arg9: memref<16x128xf32, #tpu.memory_space<vmem>>) attributes {dimension_semantics = [#tpu.dimension_semantics<arbitrary>], iteration_bounds = array<i64: 1>, scalar_prefetch = 0 : i64, scratch_operands = 0 : i64, tpu.core_type = #tpu.core_type<tc>, window_params = [{pipeline_mode = #tpu.pipeline_mode<synchronous>, transform_indices = @transform_0, window_bounds = array<i64: 16, 128>}, {pipeline_mode = #tpu.pipeline_mode<synchronous>, transform_indices = @transform_1, window_bounds = array<i64: 128, 128>}, {pipeline_mode = #tpu.pipeline_mode<synchronous>, transform_indices = @transform_2, window_bounds = array<i64: 1, 128>}, {pipeline_mode = #tpu.pipeline_mode<synchronous>, transform_indices = @transform_3, window_bounds = array<i64: 128, 128>}, {pipeline_mode = #tpu.pipeline_mode<synchronous>, transform_indices = @transform_4, window_bounds = array<i64: 1, 128>}, {pipeline_mode = #tpu.pipeline_mode<synchronous>, transform_indices = @transform_5, window_bounds = array<i64: 128, 128>}, {pipeline_mode = #tpu.pipeline_mode<synchronous>, transform_indices = @transform_6, window_bounds = array<i64: 1, 128>}, {pipeline_mode = #tpu.pipeline_mode<synchronous>, transform_indices = @transform_7, window_bounds = array<i64: 16, 128>}, {pipeline_mode = #tpu.pipeline_mode<synchronous>, transform_indices = @transform_8, window_bounds = array<i64: 16, 128>}]} {
    %c0 = arith.constant 0 : index
    %c0_0 = arith.constant 0 : index
    %0 = vector.load %arg1[%c0, %c0_0] : memref<16x128xf32, #tpu.memory_space<vmem>>, vector<16x128xf32>
    %1 = vector.extract_strided_slice %0 {offsets = [0, 16], sizes = [16, 1], strides = [1, 1]} : vector<16x128xf32> to vector<16x1xf32>
    %c0_1 = arith.constant 0 : index
    %c0_2 = arith.constant 0 : index
    %2 = vector.load %arg2[%c0_1, %c0_2] : memref<128x128xbf16, #tpu.memory_space<vmem>>, vector<128x128xbf16>
    %c0_3 = arith.constant 0 : index
    %c0_4 = arith.constant 0 : index
    %3 = vector.load %arg3[%c0_3, %c0_4] : memref<1x128xf32, #tpu.memory_space<vmem>>, vector<1x128xf32>
    %c0_5 = arith.constant 0 : index
    %c0_6 = arith.constant 0 : index
    %4 = vector.load %arg4[%c0_5, %c0_6] : memref<128x128xbf16, #tpu.memory_space<vmem>>, vector<128x128xbf16>
    %c0_7 = arith.constant 0 : index
    %c0_8 = arith.constant 0 : index
    %5 = vector.load %arg5[%c0_7, %c0_8] : memref<1x128xf32, #tpu.memory_space<vmem>>, vector<1x128xf32>
    %c0_9 = arith.constant 0 : index
    %c0_10 = arith.constant 0 : index
    %6 = vector.load %arg6[%c0_9, %c0_10] : memref<128x128xbf16, #tpu.memory_space<vmem>>, vector<128x128xbf16>
    %c0_11 = arith.constant 0 : index
    %c0_12 = arith.constant 0 : index
    %7 = vector.load %arg7[%c0_11, %c0_12] : memref<1x128xf32, #tpu.memory_space<vmem>>, vector<1x128xf32>
    %8 = arith.truncf %0 : vector<16x128xf32> to vector<16x128xbf16>
    %cst = arith.constant dense<0.000000e+00> : vector<16x128xf32>
    %9 = tpu.matmul %8, %2, %cst {dimension_numbers = #tpu.dot_dimension_numbers<[1], [0], [0], [1], [0, 0, 1, 1], [], []>} : vector<16x128xbf16>, vector<128x128xbf16>, vector<16x128xf32> -> vector<16x128xf32>
    %10 = vector.broadcast %3 : vector<1x128xf32> to vector<16x128xf32>
    %11 = arith.addf %9, %10 : vector<16x128xf32>
    %12 = math.tanh %11 : vector<16x128xf32>
    %13 = arith.truncf %12 : vector<16x128xf32> to vector<16x128xbf16>
    %cst_13 = arith.constant dense<0.000000e+00> : vector<16x128xf32>
    %14 = tpu.matmul %13, %4, %cst_13 {dimension_numbers = #tpu.dot_dimension_numbers<[1], [0], [0], [1], [0, 0, 1, 1], [], []>} : vector<16x128xbf16>, vector<128x128xbf16>, vector<16x128xf32> -> vector<16x128xf32>
    %15 = vector.broadcast %5 : vector<1x128xf32> to vector<16x128xf32>
    %16 = arith.addf %14, %15 : vector<16x128xf32>
    %17 = math.tanh %16 : vector<16x128xf32>
    %18 = arith.truncf %17 : vector<16x128xf32> to vector<16x128xbf16>
    %cst_14 = arith.constant dense<0.000000e+00> : vector<16x128xf32>
    %19 = tpu.matmul %18, %6, %cst_14 {dimension_numbers = #tpu.dot_dimension_numbers<[1], [0], [0], [1], [0, 0, 1, 1], [], []>} : vector<16x128xbf16>, vector<128x128xbf16>, vector<16x128xf32> -> vector<16x128xf32>
    %20 = vector.broadcast %7 : vector<1x128xf32> to vector<16x128xf32>
    %21 = arith.addf %19, %20 : vector<16x128xf32>
    %22 = tpu.iota {dimensions = array<i32: 0>} : vector<16x128xi32>
    %c8_i32 = arith.constant 8 : i32
    %23 = vector.broadcast %c8_i32 : i32 to vector<16x128xi32>
    %24 = arith.cmpi slt, %22, %23 : vector<16x128xi32>
    %cst_15 = arith.constant -1.000000e+30 : f32
    %25 = vector.broadcast %cst_15 : f32 to vector<16x128xf32>
    %26 = arith.select %24, %21, %25 : vector<16x128xi1>, vector<16x128xf32>
    %cst_16 = arith.constant dense<0xFF800000> : vector<128xf32>
    %27 = vector.multi_reduction <maximumf>, %26, %cst_16 [0] : vector<16x128xf32> to vector<128xf32>
    %28 = vector.shape_cast %27 : vector<128xf32> to vector<1x128xf32>
    %29 = vector.broadcast %28 : vector<1x128xf32> to vector<16x128xf32>
    %30 = arith.subf %21, %29 : vector<16x128xf32>
    %31 = math.exp %30 : vector<16x128xf32>
    %cst_17 = arith.constant 0.000000e+00 : f32
    %32 = vector.broadcast %cst_17 : f32 to vector<16x128xf32>
    %33 = arith.select %24, %31, %32 : vector<16x128xi1>, vector<16x128xf32>
    %cst_18 = arith.constant dense<0.000000e+00> : vector<128xf32>
    %34 = vector.multi_reduction <add>, %33, %cst_18 [0] : vector<16x128xf32> to vector<128xf32>
    %35 = vector.shape_cast %34 : vector<128xf32> to vector<1x128xf32>
    %36 = math.log %35 : vector<1x128xf32>
    %37 = arith.addf %28, %36 : vector<1x128xf32>
    %c0_19 = arith.constant 0 : index
    %c0_20 = arith.constant 0 : index
    %38 = vector.load %arg8[%c0_19, %c0_20] : memref<16x128xf32, #tpu.memory_space<vmem>>, vector<16x128xf32>
    %39 = tpu.iota {dimensions = array<i32: 1>} : vector<16x128xi32>
    %40 = vector.extract_strided_slice %21 {offsets = [0, 6], sizes = [16, 1], strides = [1, 1]} : vector<16x128xf32> to vector<16x1xf32>
    %41 = vector.broadcast %37 : vector<1x128xf32> to vector<16x128xf32>
    %42 = arith.subf %21, %41 : vector<16x128xf32>
    %43 = arith.fptosi %1 : vector<16x1xf32> to vector<16x1xi32>
    %44 = vector.broadcast %43 : vector<16x1xi32> to vector<16x128xi32>
    %45 = arith.cmpi eq, %39, %44 : vector<16x128xi32>
    %cst_21 = arith.constant 0.000000e+00 : f32
    %46 = vector.broadcast %cst_21 : f32 to vector<16x128xf32>
    %47 = arith.select %45, %42, %46 : vector<16x128xi1>, vector<16x128xf32>
    %cst_22 = arith.constant dense<0.000000e+00> : vector<16xf32>
    %48 = vector.multi_reduction <add>, %47, %cst_22 [1] : vector<16x128xf32> to vector<16xf32>
    %49 = vector.shape_cast %48 : vector<16xf32> to vector<16x1xf32>
    %c6_i32 = arith.constant 6 : i32
    %50 = vector.broadcast %c6_i32 : i32 to vector<16x128xi32>
    %51 = arith.cmpi slt, %39, %50 : vector<16x128xi32>
    %52 = arith.addf %21, %38 : vector<16x128xf32>
    %cst_23 = arith.constant -1.000000e+30 : f32
    %53 = vector.broadcast %cst_23 : f32 to vector<16x128xf32>
    %54 = arith.select %51, %52, %53 : vector<16x128xi1>, vector<16x128xf32>
    %cst_24 = arith.constant dense<0xFF800000> : vector<16xf32>
    %55 = vector.multi_reduction <maximumf>, %54, %cst_24 [1] : vector<16x128xf32> to vector<16xf32>
    %56 = vector.shape_cast %55 : vector<16xf32> to vector<16x1xf32>
    %57 = vector.broadcast %56 : vector<16x1xf32> to vector<16x128xf32>
    %58 = arith.cmpf oge, %54, %57 : vector<16x128xf32>
    %c128_i32 = arith.constant 128 : i32
    %59 = vector.broadcast %c128_i32 : i32 to vector<16x128xi32>
    %60 = arith.select %58, %39, %59 : vector<16x128xi1>, vector<16x128xi32>
    %cst_25 = arith.constant dense<2147483647> : vector<16xi32>
    %61 = vector.multi_reduction <minsi>, %60, %cst_25 [1] : vector<16x128xi32> to vector<16xi32>
    %62 = vector.shape_cast %61 : vector<16xi32> to vector<16x1xi32>
    %63 = vector.broadcast %62 : vector<16x1xi32> to vector<16x128xi32>
    %64 = arith.cmpi eq, %39, %63 : vector<16x128xi32>
    %cst_26 = arith.constant 0.000000e+00 : f32
    %65 = vector.broadcast %cst_26 : f32 to vector<16x128xf32>
    %66 = arith.select %64, %42, %65 : vector<16x128xi1>, vector<16x128xf32>
    %cst_27 = arith.constant dense<0.000000e+00> : vector<16xf32>
    %67 = vector.multi_reduction <add>, %66, %cst_27 [1] : vector<16x128xf32> to vector<16xf32>
    %68 = vector.shape_cast %67 : vector<16xf32> to vector<16x1xf32>
    %c0_i32 = arith.constant 0 : i32
    %69 = vector.broadcast %c0_i32 : i32 to vector<16x128xi32>
    %70 = arith.cmpi eq, %39, %69 : vector<16x128xi32>
    %71 = arith.sitofp %62 : vector<16x1xi32> to vector<16x1xf32>
    %c1_i32 = arith.constant 1 : i32
    %72 = vector.broadcast %c1_i32 : i32 to vector<16x128xi32>
    %73 = arith.cmpi eq, %39, %72 : vector<16x128xi32>
    %c2_i32 = arith.constant 2 : i32
    %74 = vector.broadcast %c2_i32 : i32 to vector<16x128xi32>
    %75 = arith.cmpi eq, %39, %74 : vector<16x128xi32>
    %c3_i32 = arith.constant 3 : i32
    %76 = vector.broadcast %c3_i32 : i32 to vector<16x128xi32>
    %77 = arith.cmpi eq, %39, %76 : vector<16x128xi32>
    %cst_28 = arith.constant 0.000000e+00 : f32
    %78 = vector.shape_cast %40 : vector<16x1xf32> to vector<16x1xf32>
    %79 = vector.broadcast %78 : vector<16x1xf32> to vector<16x128xf32>
    %80 = vector.broadcast %cst_28 : f32 to vector<16x128xf32>
    %81 = arith.select %77, %79, %80 : vector<16x128xi1>, vector<16x128xf32>
    %82 = vector.shape_cast %68 : vector<16x1xf32> to vector<16x1xf32>
    %83 = vector.broadcast %82 : vector<16x1xf32> to vector<16x128xf32>
    %84 = arith.select %75, %83, %81 : vector<16x128xi1>, vector<16x128xf32>
    %85 = vector.shape_cast %49 : vector<16x1xf32> to vector<16x1xf32>
    %86 = vector.broadcast %85 : vector<16x1xf32> to vector<16x128xf32>
    %87 = arith.select %73, %86, %84 : vector<16x128xi1>, vector<16x128xf32>
    %88 = vector.shape_cast %71 : vector<16x1xf32> to vector<16x1xf32>
    %89 = vector.broadcast %88 : vector<16x1xf32> to vector<16x128xf32>
    %90 = arith.select %70, %89, %87 : vector<16x128xi1>, vector<16x128xf32>
    %c0_29 = arith.constant 0 : index
    %c0_30 = arith.constant 0 : index
    %91 = vector.load %arg9[%c0_29, %c0_30] : memref<16x128xf32, #tpu.memory_space<vmem>>, vector<16x128xf32>
    tpu.vector_store %arg9[%c0_29, %c0_30], %90 {strides = array<i32>} : memref<16x128xf32, #tpu.memory_space<vmem>>, vector<16x128xf32>,
    return
  }
  func.func @transform_0(%arg0: i32) -> (i32, i32) {
    %c0_i32 = arith.constant 0 : i32
    %c0_i32_0 = arith.constant 0 : i32
    %c0_i32_1 = arith.constant 0 : i32
    return %c0_i32, %c0_i32_0 : i32, i32
  }
  func.func @transform_1(%arg0: i32) -> (i32, i32) {
    %c0_i32 = arith.constant 0 : i32
    %c0_i32_0 = arith.constant 0 : i32
    %c0_i32_1 = arith.constant 0 : i32
    return %c0_i32, %c0_i32_0 : i32, i32
  }
  func.func @transform_2(%arg0: i32) -> (i32, i32) {
    %c0_i32 = arith.constant 0 : i32
    %c0_i32_0 = arith.constant 0 : i32
    %c0_i32_1 = arith.constant 0 : i32
    return %c0_i32, %c0_i32_0 : i32, i32
  }
  func.func @transform_3(%arg0: i32) -> (i32, i32) {
    %c0_i32 = arith.constant 0 : i32
    %c0_i32_0 = arith.constant 0 : i32
    %c0_i32_1 = arith.constant 0 : i32
    return %c0_i32, %c0_i32_0 : i32, i32
  }
  func.func @transform_4(%arg0: i32) -> (i32, i32) {
    %c0_i32 = arith.constant 0 : i32
    %c0_i32_0 = arith.constant 0 : i32
    %c0_i32_1 = arith.constant 0 : i32
    return %c0_i32, %c0_i32_0 : i32, i32
  }
  func.func @transform_5(%arg0: i32) -> (i32, i32) {
    %c0_i32 = arith.constant 0 : i32
    %c0_i32_0 = arith.constant 0 : i32
    %c0_i32_1 = arith.constant 0 : i32
    return %c0_i32, %c0_i32_0 : i32, i32
  }
  func.func @transform_6(%arg0: i32) -> (i32, i32) {
    %c0_i32 = arith.constant 0 : i32
    %c0_i32_0 = arith.constant 0 : i32
    %c0_i32_1 = arith.constant 0 : i32
    return %c0_i32, %c0_i32_0 : i32, i32
  }
  func.func @transform_7(%arg0: i32) -> (i32, i32) {
    %c0_i32 = arith.constant 0 : i32
    %c0_i32_0 = arith.constant 0 : i32
    %c0_i32_1 = arith.constant 0 : i32
    return %c0_i32, %c0_i32_0 : i32, i32
  }
  func.func @transform_8(%arg0: i32) -> (i32, i32) {
    %c0_i32 = arith.constant 0 : i32
    %c0_i32_0 = arith.constant 0 : i32
    %c0_i32_1 = arith.constant 0 : i32
    return %c0_i32, %c0_i32_0 : i32, i32
  }
}

</mosaic_0001>

<llo_original>
// kernel: forward.1
$region0: #{forward.1}
  #allocation0 [shape = 'u32[]', space=smem, size = 0x4, offset = 0x4, fixed_abs, tag = 'smem constant byte address 0x4 - core index']
  #allocation1 [shape = 'u32[144,128]{1,0:T(1,128)}', space=vmem, size = 0x12000, scoped, tag = 'internal scratch']
  %s0 = inlined_call_operand.vmem [shape: f32[16,128], index: 0, kind: input, shape index: {}]
  %s1 = inlined_call_operand.vmem [shape: bf16[128,128], index: 1, kind: input, shape index: {}]
  %s2 = inlined_call_operand.vmem [shape: f32[1,128], index: 2, kind: input, shape index: {}]
  %s3 = inlined_call_operand.vmem [shape: bf16[128,128], index: 3, kind: input, shape index: {}]
  %s4 = inlined_call_operand.vmem [shape: f32[1,128], index: 4, kind: input, shape index: {}]
  %s5 = inlined_call_operand.hbm [shape: bf16[128,128], index: 5, kind: input, shape index: {}]
  %s6 = inlined_call_operand.vmem [shape: f32[1,128], index: 6, kind: input, shape index: {}]
  %s7 = inlined_call_operand.vmem [shape: f32[16,128], index: 7, kind: input, shape index: {}]
  %s8 = inlined_call_operand.vmem [shape: f32[16,128], index: 8, kind: output, shape index: {}]
  %s9 = sld [smem:[#allocation0]]
  $region46: #{forward.1} parent=0
    _
  %s11 = ssub.s32 1, %s9
  %s12 = scalar_select 0, %s11, %s9
  $region1: #{forward.1} parent=0
    #allocation2 [shape = 'u8[32768]{0}', space=vmem, size = 0x8000, scoped, tag = 'input window, operand 5, single buffered']
    #allocation3 [shape = 's32[1]{0}', space=sflag, size = 0x4, scoped, tag = 'scoped memory for forward.1']
    %13 = vsyncpa [#allocation3], 0
    // Predicated region
    $region2: #{forward.1} parent=1 // pred_check
      _
    $region3: #{forward.1} parent=1 // pred_check_branch
      %15 = sbr.rel (0) target = $region5
    $region4: #{forward.1} parent=1 // pred_region
      _
    $region5: #{forward.1} parent=1 // pred_fallthru
      _
    // Predicated region
    $region6: #{forward.1} parent=1 // pred_check
      _
    $region7: #{forward.1} parent=1 // pred_check_branch
      %17 = sbr.rel (0) target = $region9
    $region8: #{forward.1} parent=1 // pred_region
      _
    $region9: #{forward.1} parent=1 // pred_fallthru
      _
    // Predicated region
    $region10: #{forward.1} parent=1 // pred_check
      _
    $region11: #{forward.1} parent=1 // pred_check_branch
      %19 = sbr.rel (0) target = $region13
    $region12: #{forward.1} parent=1 // pred_region
      _
    $region13: #{forward.1} parent=1 // pred_fallthru
      _
    // Predicated region
    $region14: #{forward.1} parent=1 // pred_check
      _
    $region15: #{forward.1} parent=1 // pred_check_branch
      %21 = sbr.rel (0) target = $region17
    $region16: #{forward.1} parent=1 // pred_region
      _
    $region17: #{forward.1} parent=1 // pred_fallthru
      _
    // Predicated region
    $region18: #{forward.1} parent=1 // pred_check
      _
    $region19: #{forward.1} parent=1 // pred_check_branch
      %23 = sbr.rel (0) target = $region21
    $region20: #{forward.1} parent=1 // pred_region
      _
    $region21: #{forward.1} parent=1 // pred_fallthru
      _
    // Predicated region
    $region22: #{forward.1} parent=1 // pred_check
      _
    $region23: #{forward.1} parent=1 // pred_check_branch
      %25 = sbr.rel (0) target = $region25
    $region24: #{forward.1} parent=1 // pred_region
      %s27 = ssub.s32 1024, 1024
      %28 = vsyncadd [#allocation3], %s27
      %s29 = sshll.u32 [#allocation2], 4
      %s30 = int_to_ptr.vmem [resolvable:$true] %s29
      %35 = dma.hbm_to_vmem [thread:$0]  %s5, 1024, %s30, [#allocation3], 64, 64, 4
    $region25: #{forward.1} parent=1 // pred_fallthru
      _
    // Predicated region
    $region26: #{forward.1} parent=1 // pred_check
      _
    $region27: #{forward.1} parent=1 // pred_check_branch
      %37 = sbr.rel (0) target = $region29
    $region28: #{forward.1} parent=1 // pred_region
      _
    $region29: #{forward.1} parent=1 // pred_fallthru
      _
    // Predicated region
    $region30: #{forward.1} parent=1 // pred_check
      _
    $region31: #{forward.1} parent=1 // pred_check_branch
      %39 = sbr.rel (0) target = $region33
    $region32: #{forward.1} parent=1 // pred_region
      _
    $region33: #{forward.1} parent=1 // pred_fallthru
      _
    // Predicated region
    $region34: #{forward.1} parent=1 // pred_check
      _
    $region35: #{forward.1} parent=1 // pred_check_branch
      %41 = sbr.rel (0) target = $region37
    $region36: #{forward.1} parent=1 // pred_region
      %42 = dma.done [#allocation3], 1024
    $region37: #{forward.1} parent=1 // pred_fallthru
      _
    %v44 = vld [vmem:[%s0] sm:$0xff]
    %v45 = vld [vmem:[%s0 + $0x8] sm:$0xff]
    %v46 = vld [vmem:[%s1] sm:$0xf]
    %v47 = vld [vmem:[%s1 + $0x4] sm:$0xf]
    %v48 = vld [vmem:[%s1 + $0x8] sm:$0xf]
    %v49 = vld [vmem:[%s1 + $0xc] sm:$0xf]
    %v50 = vld [vmem:[%s1 + $0x10] sm:$0xf]
    %v51 = vld [vmem:[%s1 + $0x14] sm:$0xf]
    %v52 = vld [vmem:[%s1 + $0x18] sm:$0xf]
    %v53 = vld [vmem:[%s1 + $0x1c] sm:$0xf]
    %v54 = vld [vmem:[%s1 + $0x20] sm:$0xf]
    %v55 = vld [vmem:[%s1 + $0x24] sm:$0xf]
    %v56 = vld [vmem:[%s1 + $0x28] sm:$0xf]
    %v57 = vld [vmem:[%s1 + $0x2c] sm:$0xf]
    %v58 = vld [vmem:[%s1 + $0x30] sm:$0xf]
    %v59 = vld [vmem:[%s1 + $0x34] sm:$0xf]
    %v60 = vld [vmem:[%s1 + $0x38] sm:$0xf]
    %v61 = vld [vmem:[%s1 + $0x3c] sm:$0xf]
    %v62 = vld [vmem:[%s2] sm:$0x1]
    %v63 = vld [vmem:[%s3] sm:$0xf]
    %v64 = vld [vmem:[%s3 + $0x4] sm:$0xf]
    %v65 = vld [vmem:[%s3 + $0x8] sm:$0xf]
    %v66 = vld [vmem:[%s3 + $0xc] sm:$0xf]
    %v67 = vld [vmem:[%s3 + $0x10] sm:$0xf]
    %v68 = vld [vmem:[%s3 + $0x14] sm:$0xf]
    %v69 = vld [vmem:[%s3 + $0x18] sm:$0xf]
    %v70 = vld [vmem:[%s3 + $0x1c] sm:$0xf]
    %v71 = vld [vmem:[%s3 + $0x20] sm:$0xf]
    %v72 = vld [vmem:[%s3 + $0x24] sm:$0xf]
    %v73 = vld [vmem:[%s3 + $0x28] sm:$0xf]
    %v74 = vld [vmem:[%s3 + $0x2c] sm:$0xf]
    %v75 = vld [vmem:[%s3 + $0x30] sm:$0xf]
    %v76 = vld [vmem:[%s3 + $0x34] sm:$0xf]
    %v77 = vld [vmem:[%s3 + $0x38] sm:$0xf]
    %v78 = vld [vmem:[%s3 + $0x3c] sm:$0xf]
    %v79 = vld [vmem:[%s4] sm:$0x1]
    %v80 = vld [vmem:[#allocation2] sm:$0xf]
    %v81 = vld [vmem:[#allocation2 + $0x4] sm:$0xf]
    %v82 = vld [vmem:[#allocation2 + $0x8] sm:$0xf]
    %v83 = vld [vmem:[#allocation2 + $0xc] sm:$0xf]
    %v84 = vld [vmem:[#allocation2 + $0x10] sm:$0xf]
    %v85 = vld [vmem:[#allocation2 + $0x14] sm:$0xf]
    %v86 = vld [vmem:[#allocation2 + $0x18] sm:$0xf]
    %v87 = vld [vmem:[#allocation2 + $0x1c] sm:$0xf]
    %v88 = vld [vmem:[#allocation2 + $0x20] sm:$0xf]
    %v89 = vld [vmem:[#allocation2 + $0x24] sm:$0xf]
    %v90 = vld [vmem:[#allocation2 + $0x28] sm:$0xf]
    %v91 = vld [vmem:[#allocation2 + $0x2c] sm:$0xf]
    %v92 = vld [vmem:[#allocation2 + $0x30] sm:$0xf]
    %v93 = vld [vmem:[#allocation2 + $0x34] sm:$0xf]
    %v94 = vld [vmem:[#allocation2 + $0x38] sm:$0xf]
    %v95 = vld [vmem:[#allocation2 + $0x3c] sm:$0xf]
    %v96 = vld [vmem:[%s6] sm:$0x1]
    %v97 = vpack.c.bf16 %v45, %v44
    %v99 = vlaneseq
    %v100 = vshrl.u32 %v99, 7
    %v101 = vsub.s32 0, %v100
    %v102 = vrot.slane %v62, %v101
    %v120 = vunpack.c.l.b16 %v46
    %v121 = vunpack.c.l.b16 %v47
    %v122 = vunpack.c.l.b16 %v48
    %v123 = vunpack.c.l.b16 %v49
    %v124 = vunpack.c.l.b16 %v50
    %v125 = vunpack.c.l.b16 %v51
    %v126 = vunpack.c.l.b16 %v52
    %v127 = vunpack.c.l.b16 %v53
    %v128 = vunpack.c.l.b16 %v54
    %v129 = vunpack.c.l.b16 %v55
    %v130 = vunpack.c.l.b16 %v56
    %v131 = vunpack.c.l.b16 %v57
    %v132 = vunpack.c.l.b16 %v58
    %v133 = vunpack.c.l.b16 %v59
    %v134 = vunpack.c.l.b16 %v60
    %v135 = vunpack.c.l.b16 %v61
    %v136 = vpack.c.b16 %v121, %v120
    %v137 = vpack.c.b16 %v123, %v122
    %v138 = vpack.c.b16 %v125, %v124
    %v139 = vpack.c.b16 %v127, %v126
    %v140 = vpack.c.b16 %v129, %v128
    %v141 = vpack.c.b16 %v131, %v130
    %v142 = vpack.c.b16 %v133, %v132
    %v143 = vpack.c.b16 %v135, %v134
    %152 = vmatprep.subr.bf16.mxu0 0
    %153 = vmatpush1.bf16.msra.mxu0 %v143
    %154 = vmatprep.subr.bf16.mxu0 0
    %155 = vmatpush1.bf16.msra.mxu0 %v142
    %156 = vmatprep.subr.bf16.mxu0 0
    %157 = vmatpush1.bf16.msra.mxu0 %v141
    %158 = vmatprep.subr.bf16.mxu0 0
    %159 = vmatpush1.bf16.msra.mxu0 %v140
    %160 = vmatprep.subr.bf16.mxu0 0
    %161 = vmatpush1.bf16.msra.mxu0 %v139
    %162 = vmatprep.subr.bf16.mxu0 0
    %163 = vmatpush1.bf16.msra.mxu0 %v138
    %164 = vmatprep.subr.bf16.mxu0 0
    %165 = vmatpush1.bf16.msra.mxu0 %v137
    %166 = vmatprep.subr.bf16.mxu0 0
    %167 = vmatpush1.bf16.msra.mxu0 %v136
    %168 = vmatprep.subr.bf16.mxu0 0
    %169 = vmatpush2.bf16.msra.mxu0 0
    %170 = vmatprep.subr.bf16.mxu0 0
    %171 = vmatpush2.bf16.msra.mxu0 0
    %172 = vmatprep.subr.bf16.mxu0 0
    %173 = vmatpush2.bf16.msra.mxu0 0
    %174 = vmatprep.subr.bf16.mxu0 0
    %175 = vmatpush2.bf16.msra.mxu0 0
    %176 = vmatprep.subr.bf16.mxu0 0
    %177 = vmatpush2.bf16.msra.mxu0 0
    %178 = vmatprep.subr.bf16.mxu0 0
    %179 = vmatpush2.bf16.msra.mxu0 0
    %180 = vmatprep.subr.bf16.mxu0 0
    %181 = vmatpush2.bf16.msra.mxu0 0
    %182 = vmatprep.subr.bf16.mxu0 0
    %183 = vmatpush2.bf16.msra.mxu0 0
    %184 = vmatprep.mubr.bf16.mxu0 0
    %185 = vmatmul.mubr.bf16.gmra.mxu0 %v97
    %v186 = vpop.f32.mrf.mxu0
    %v187 = vadd.f32 %v102, %v186
    %v188 = vpop.f32.mrf.mxu0
    %v189 = vpop.f32.mrf.mxu0
    %v190 = vadd.f32 %v102, %v189
    %v191 = vpop.f32.mrf.mxu0
    %192 = vdwg.mxu0
    %v193 = vtanh.pop %v187
    %v194 = vtanh.pop %v190
    %v195 = vpack.c.bf16 %v194, %v193
    %v197 = vlaneseq
    %v198 = vshrl.u32 %v197, 7
    %v199 = vsub.s32 0, %v198
    %v200 = vrot.slane %v79, %v199
    %v218 = vunpack.c.l.b16 %v63
    %v219 = vunpack.c.l.b16 %v64
    %v220 = vunpack.c.l.b16 %v65
    %v221 = vunpack.c.l.b16 %v66
    %v222 = vunpack.c.l.b16 %v67
    %v223 = vunpack.c.l.b16 %v68
    %v224 = vunpack.c.l.b16 %v69
    %v225 = vunpack.c.l.b16 %v70
    %v226 = vunpack.c.l.b16 %v71
    %v227 = vunpack.c.l.b16 %v72
    %v228 = vunpack.c.l.b16 %v73
    %v229 = vunpack.c.l.b16 %v74
    %v230 = vunpack.c.l.b16 %v75
    %v231 = vunpack.c.l.b16 %v76
    %v232 = vunpack.c.l.b16 %v77
    %v233 = vunpack.c.l.b16 %v78
    %v234 = vpack.c.b16 %v219, %v218
    %v235 = vpack.c.b16 %v221, %v220
    %v236 = vpack.c.b16 %v223, %v222
    %v237 = vpack.c.b16 %v225, %v224
    %v238 = vpack.c.b16 %v227, %v226
    %v239 = vpack.c.b16 %v229, %v228
    %v240 = vpack.c.b16 %v231, %v230
    %v241 = vpack.c.b16 %v233, %v232
    %250 = vmatprep.subr.bf16.mxu0 0
    %251 = vmatpush1.bf16.msra.mxu0 %v241
    %252 = vmatprep.subr.bf16.mxu0 0
    %253 = vmatpush1.bf16.msra.mxu0 %v240
    %254 = vmatprep.subr.bf16.mxu0 0
    %255 = vmatpush1.bf16.msra.mxu0 %v239
    %256 = vmatprep.subr.bf16.mxu0 0
    %257 = vmatpush1.bf16.msra.mxu0 %v238
    %258 = vmatprep.subr.bf16.mxu0 0
    %259 = vmatpush1.bf16.msra.mxu0 %v237
    %260 = vmatprep.subr.bf16.mxu0 0
    %261 = vmatpush1.bf16.msra.mxu0 %v236
    %262 = vmatprep.subr.bf16.mxu0 0
    %263 = vmatpush1.bf16.msra.mxu0 %v235
    %264 = vmatprep.subr.bf16.mxu0 0
    %265 = vmatpush1.bf16.msra.mxu0 %v234
    %266 = vmatprep.subr.bf16.mxu0 0
    %267 = vmatpush2.bf16.msra.mxu0 0
    %268 = vmatprep.subr.bf16.mxu0 0
    %269 = vmatpush2.bf16.msra.mxu0 0
    %270 = vmatprep.subr.bf16.mxu0 0
    %271 = vmatpush2.bf16.msra.mxu0 0
    %272 = vmatprep.subr.bf16.mxu0 0
    %273 = vmatpush2.bf16.msra.mxu0 0
    %274 = vmatprep.subr.bf16.mxu0 0
    %275 = vmatpush2.bf16.msra.mxu0 0
    %276 = vmatprep.subr.bf16.mxu0 0
    %277 = vmatpush2.bf16.msra.mxu0 0
    %278 = vmatprep.subr.bf16.mxu0 0
    %279 = vmatpush2.bf16.msra.mxu0 0
    %280 = vmatprep.subr.bf16.mxu0 0
    %281 = vmatpush2.bf16.msra.mxu0 0
    %282 = vmatprep.mubr.bf16.mxu0 0
    %283 = vmatmul.mubr.bf16.gmra.mxu0 %v195
    %v284 = vpop.f32.mrf.mxu0
    %v285 = vadd.f32 %v200, %v284
    %v286 = vpop.f32.mrf.mxu0
    %v287 = vpop.f32.mrf.mxu0
    %v288 = vadd.f32 %v200, %v287
    %v289 = vpop.f32.mrf.mxu0
    %290 = vdwg.mxu0
    %v291 = vtanh.pop %v285
    %v292 = vtanh.pop %v288
    %v293 = vpack.c.bf16 %v292, %v291
    %v295 = vlaneseq
    %v296 = vshrl.u32 %v295, 7
    %v297 = vsub.s32 0, %v296
    %v298 = vrot.slane %v96, %v297
    %v316 = vunpack.c.l.b16 %v80
    %v317 = vunpack.c.l.b16 %v81
    %v318 = vunpack.c.l.b16 %v82
    %v319 = vunpack.c.l.b16 %v83
    %v320 = vunpack.c.l.b16 %v84
    %v321 = vunpack.c.l.b16 %v85
    %v322 = vunpack.c.l.b16 %v86
    %v323 = vunpack.c.l.b16 %v87
    %v324 = vunpack.c.l.b16 %v88
    %v325 = vunpack.c.l.b16 %v89
    %v326 = vunpack.c.l.b16 %v90
    %v327 = vunpack.c.l.b16 %v91
    %v328 = vunpack.c.l.b16 %v92
    %v329 = vunpack.c.l.b16 %v93
    %v330 = vunpack.c.l.b16 %v94
    %v331 = vunpack.c.l.b16 %v95
    %v332 = vpack.c.b16 %v317, %v316
    %v333 = vpack.c.b16 %v319, %v318
    %v334 = vpack.c.b16 %v321, %v320
    %v335 = vpack.c.b16 %v323, %v322
    %v336 = vpack.c.b16 %v325, %v324
    %v337 = vpack.c.b16 %v327, %v326
    %v338 = vpack.c.b16 %v329, %v328
    %v339 = vpack.c.b16 %v331, %v330
    %348 = vmatprep.subr.bf16.mxu0 0
    %349 = vmatpush1.bf16.msra.mxu0 %v339
    %350 = vmatprep.subr.bf16.mxu0 0
    %351 = vmatpush1.bf16.msra.mxu0 %v338
    %352 = vmatprep.subr.bf16.mxu0 0
    %353 = vmatpush1.bf16.msra.mxu0 %v337
    %354 = vmatprep.subr.bf16.mxu0 0
    %355 = vmatpush1.bf16.msra.mxu0 %v336
    %356 = vmatprep.subr.bf16.mxu0 0
    %357 = vmatpush1.bf16.msra.mxu0 %v335
    %358 = vmatprep.subr.bf16.mxu0 0
    %359 = vmatpush1.bf16.msra.mxu0 %v334
    %360 = vmatprep.subr.bf16.mxu0 0
    %361 = vmatpush1.bf16.msra.mxu0 %v333
    %362 = vmatprep.subr.bf16.mxu0 0
    %363 = vmatpush1.bf16.msra.mxu0 %v332
    %364 = vmatprep.subr.bf16.mxu0 0
    %365 = vmatpush2.bf16.msra.mxu0 0
    %366 = vmatprep.subr.bf16.mxu0 0
    %367 = vmatpush2.bf16.msra.mxu0 0
    %368 = vmatprep.subr.bf16.mxu0 0
    %369 = vmatpush2.bf16.msra.mxu0 0
    %370 = vmatprep.subr.bf16.mxu0 0
    %371 = vmatpush2.bf16.msra.mxu0 0
    %372 = vmatprep.subr.bf16.mxu0 0
    %373 = vmatpush2.bf16.msra.mxu0 0
    %374 = vmatprep.subr.bf16.mxu0 0
    %375 = vmatpush2.bf16.msra.mxu0 0
    %376 = vmatprep.subr.bf16.mxu0 0
    %377 = vmatpush2.bf16.msra.mxu0 0
    %378 = vmatprep.subr.bf16.mxu0 0
    %379 = vmatpush2.bf16.msra.mxu0 0
    %380 = vmatprep.mubr.bf16.mxu0 0
    %381 = vmatmul.mubr.bf16.gmra.mxu0 %v293
    %v382 = vpop.f32.mrf.mxu0
    %v383 = vadd.f32 %v298, %v382
    %v384 = vpop.f32.mrf.mxu0
    %v385 = vpop.f32.mrf.mxu0
    %v386 = vadd.f32 %v298, %v385
    %v387 = vpop.f32.mrf.mxu0
    %388 = vdwg.mxu0
    %v389 = vlaneseq
    %v390 = vshrl.u32 %v389, 7
    %v391 = vadd.s32 %v390, 8
    %vm392 = vcmp.lt.s32.totalorder %v390, 8
    %vm393 = vcmp.lt.s32.totalorder %v391, 8
    %v394 = vsel %vm392, %v383, -1e+30
    %v395 = vsel %vm393, %v386, -1e+30
    %v396 = vmax.f32 %v394, %v395
    %v397 = vrot.slane %v396, 4
    %v398 = vmax.f32 %v396, %v397
    %v399 = vrot.slane %v398, 2
    %v400 = vmax.f32 %v398, %v399
    %v401 = vrot.slane %v400, 1
    %v402 = vmax.f32 %v400, %v401
    %v403 = vsub.f32 %v383, %v402
    %v404 = vsub.f32 %v386, %v402
    %v405 = vmul.f32 %v403, 1.442695
    %v406 = vpow.pop %v405
    %v407 = vmul.f32 %v404, 1.442695
    %v408 = vpow.pop %v407
    %v409 = vsel %vm392, %v406, 0.0
    %v410 = vsel %vm393, %v408, 0.0
    %v411 = vadd.f32 %v409, %v410
    %v412 = vrot.slane %v411, 4
    %v413 = vadd.f32 %v411, %v412
    %v414 = vrot.slane %v413, 2
    %v415 = vadd.f32 %v413, %v414
    %v416 = vrot.slane %v415, 1
    %v417 = vadd.f32 %v415, %v416
    %v418 = vlog2.pop %v417
    %v419 = vmul.f32 %v418, 0.6931472
    %v420 = vadd.f32 %v402, %v419
    %v421 = vld [vmem:[%s7] sm:$0xff]
    %v422 = vld [vmem:[%s7 + $0x8] sm:$0xff]
    %v423 = vlaneseq
    %v424 = vand.u32 %v423, 127
    %v425 = vsub.f32 %v383, %v420
    %v426 = vsub.f32 %v386, %v420
    %v427 = vcvt.f32.s32.to.zero.pseudo %v44
    %v428 = vcvt.f32.s32.to.zero.pseudo %v45
    %429 = vset.pattern.permute.xlu0 16
    %430 = vperm.xlu0 %429, %v427
    %v431 = vpop.permute.xlu0 %430
    %432 = vset.pattern.permute.xlu0 16
    %433 = vperm.xlu0 %432, %v428
    %v434 = vpop.permute.xlu0 %433
    %vm435 = vcmp.eq.s32.totalorder %v424, %v431
    %vm436 = vcmp.eq.s32.totalorder %v424, %v434
    %v437 = vsel %vm435, %v425, 0.0
    %v438 = vsel %vm436, %v426, 0.0
    %439 = vadd.xlane.f32.xlu0 %v437
    %v440 = vpop.xlane.xlu0 %439
    %441 = vadd.xlane.f32.xlu0 %v438
    %v442 = vpop.xlane.xlu0 %441
    %vm443 = vcmp.lt.s32.totalorder %v424, 6
    %v444 = vadd.f32 %v383, %v421
    %v445 = vadd.f32 %v386, %v422
    %v446 = vsel %vm443, %v444, -1e+30
    %v447 = vsel %vm443, %v445, -1e+30
    %448 = vmax.xlane.f32.xlu0 %v446
    %v449 = vpop.xlane.xlu0 %448
    %450 = vmax.xlane.f32.xlu0 %v447
    %v451 = vpop.xlane.xlu0 %450
    %vm452 = vcmp.ge.f32.partialorder %v446, %v449
    %vm453 = vcmp.ge.f32.partialorder %v447, %v451
    %v454 = vsel %vm452, %v424, 128
    %v455 = vsel %vm453, %v424, 128
    %v456 = vand.u32 %v454, 65535
    %v457 = vshra.s32 %v454, 16
    %v458 = vcvt.s32.f32 %v456
    %v459 = vcvt.s32.f32 %v457
    %460 = vmin.xlane.f32.xlu0 %v459
    %v461 = vpop.xlane.xlu0 %460
    %vm462 = vcmp.eq.f32.partialorder %v459, %v461
    %v463 = vsel %vm462, %v458, inf
    %464 = vmin.xlane.f32.xlu0 %v463
    %v465 = vpop.xlane.xlu0 %464
    %v466 = vcvt.f32.s32 %v465
    %v467 = vcvt.f32.s32 %v461
    %v468 = vshll.u32 %v467, 16
    %v469 = vadd.s32 %v468, %v466
    %v470 = vand.u32 %v455, 65535
    %v471 = vshra.s32 %v455, 16
    %v472 = vcvt.s32.f32 %v470
    %v473 = vcvt.s32.f32 %v471
    %474 = vmin.xlane.f32.xlu0 %v473
    %v475 = vpop.xlane.xlu0 %474
    %vm476 = vcmp.eq.f32.partialorder %v473, %v475
    %v477 = vsel %vm476, %v472, inf
    %478 = vmin.xlane.f32.xlu0 %v477
    %v479 = vpop.xlane.xlu0 %478
    %v480 = vcvt.f32.s32 %v479
    %v481 = vcvt.f32.s32 %v475
    %v482 = vshll.u32 %v481, 16
    %v483 = vadd.s32 %v482, %v480
    %vm484 = vcmp.eq.s32.totalorder %v424, %v469
    %vm485 = vcmp.eq.s32.totalorder %v424, %v483
    %v486 = vsel %vm484, %v425, 0.0
    %v487 = vsel %vm485, %v426, 0.0
    %488 = vadd.xlane.f32.xlu0 %v486
    %v489 = vpop.xlane.xlu0 %488
    %490 = vadd.xlane.f32.xlu0 %v487
    %v491 = vpop.xlane.xlu0 %490
    %vm492 = vcmp.eq.s32.totalorder %v424, 0
    %v493 = vcvt.s32.f32 %v469
    %v494 = vcvt.s32.f32 %v483
    %vm495 = vcmp.eq.s32.totalorder %v424, 1
    %vm496 = vcmp.eq.s32.totalorder %v424, 2
    %vm497 = vcmp.eq.s32.totalorder %v424, 3
    %499 = vset.pattern.permute.xlu0 6
    %500 = vperm.xlu0 %499, %v383
    %v501 = vpop.permute.xlu0 %500
    %504 = vset.pattern.permute.xlu0 6
    %505 = vperm.xlu0 %504, %v386
    %v506 = vpop.permute.xlu0 %505
    %v508 = vsel %vm497, %v501, 0.0
    %v509 = vsel %vm497, %v506, 0.0
    %v510 = vsel %vm496, %v489, %v508
    %v511 = vsel %vm496, %v491, %v509
    %v512 = vsel %vm495, %v440, %v510
    %v513 = vsel %vm495, %v442, %v511
    %v514 = vsel %vm492, %v493, %v512
    %v515 = vsel %vm492, %v494, %v513
    %516 = vst [vmem:[%s8] sm:$0xff] %v514
    %517 = vst [vmem:[%s8 + $0x8] sm:$0xff] %v515
    // Predicated region
    $region38: #{forward.1} parent=1 // pred_check
      _
    $region39: #{forward.1} parent=1 // pred_check_branch
      %519 = sbr.rel (0) target = $region41
    $region40: #{forward.1} parent=1 // pred_region
      _
    $region41: #{forward.1} parent=1 // pred_fallthru
      _
    // Predicated region
    $region42: #{forward.1} parent=1 // pred_check
      _
    $region43: #{forward.1} parent=1 // pred_check_branch
      %521 = sbr.rel (0) target = $region45
    $region44: #{forward.1} parent=1 // pred_region
      _
    $region45: #{forward.1} parent=1 // pred_fallthru
      _
    %522 = vsyncpa [#allocation3], 1

</llo_original>
